<compile_context>
chip_gen: v7x
topology: tpu7x:2x2x1
jax: 0.10.0
libtpu: 0.0.40
codegen_flags: <defaults>
</compile_context>

<pallas_src>
import functools

import jax
import jax.numpy as jnp
from jax.experimental import pallas as pl
from jax.experimental.pallas import tpu as pltpu


def _round_up(a, m):
    return ((a + m - 1) // m) * m


def _vmem_capacity_bytes():
    """Physical VMEM per TensorCore, with a conservative fallback."""
    try:
        info = pltpu.get_tpu_info()
        cap = getattr(info, "vmem_capacity_bytes", None)
        if cap:
            return int(cap)
    except Exception:
        pass
    return 64 << 20          # v7x per-TC size; safe lower bound for v5e/v6e too


def _pad_lanes(a, width):
    """Zero-pad the lane (last) axis of a 2-D value up to `width`."""
    if a.shape[1] == width:
        return a
    return jnp.concatenate(
        [a, jnp.zeros((a.shape[0], width - a.shape[1]), a.dtype)], axis=1)


def _hetero_gcn_kernel(a_ref, x_ref, x0_ref, wa_ref, wx_ref, b_ref, o_ref, acc_ref,
                       *, use_weight: bool, use_init: bool, f_in: int, f_half: int):
    k = pl.program_id(1)

    @pl.when(k == 0)
    def _init():
        acc_ref[...] = jnp.zeros_like(acc_ref)

    # Partial aggregation: adj[i-tile, k-tile] @ x[k-tile]   (bf16 in, f32 MXU acc).
    acc_ref[...] += jnp.dot(a_ref[...], x_ref[...],
                            preferred_element_type=jnp.float32)

    @pl.when(k == pl.num_programs(1) - 1)
    def _finalize():
        agg = acc_ref[...]
        if use_weight:
            # concat([agg, x0], 1) @ W == agg @ W_agg + x0 @ W_x0 (pre-split).
            out = jnp.dot(agg, wa_ref[...], preferred_element_type=jnp.float32)
            if use_init:
                out = out + jnp.dot(x0_ref[...].astype(jnp.float32), wx_ref[...],
                                    preferred_element_type=jnp.float32)
            o_ref[...] = (out + b_ref[...]).astype(o_ref.dtype)
        else:
            agg_p = _pad_lanes(agg, f_half)
            if use_init:
                # Disjoint 128-aligned lane slices -> unmasked stores; the
                # wrapper slices the (agg, x0) halves back out.
                o_ref[:, pl.ds(0, f_half)] = agg_p.astype(o_ref.dtype)
                o_ref[:, pl.ds(f_half, f_half)] = _pad_lanes(
                    x0_ref[...].astype(jnp.float32), f_half).astype(o_ref.dtype)
            else:
                o_ref[...] = agg_p.astype(o_ref.dtype)


def build_normalized_adjacency(edge_index, edge_weight, num_nodes,
                               out_dtype=jnp.bfloat16):
    """Dense normalized adjacency (adj[col, row] = w * d^-1/2 * d^-1/2).

    Build once for static graphs and pass via `adj=` to amortize the f32
    scatter-add across layers/steps."""
    row, col = edge_index[0], edge_index[1]
    d = jnp.zeros((num_nodes,), jnp.float32).at[col].add(1.0)
    value = (edge_weight.astype(jnp.float32)
             * jnp.sqrt(1.0 / d[col]) * jnp.sqrt(1.0 / d[row]))
    value = jnp.nan_to_num(value, nan=0.0, posinf=0.0, neginf=0.0)
    adj = jnp.zeros((num_nodes, num_nodes), jnp.float32).at[col, row].add(value)
    return adj.astype(out_dtype)


def hetero_graph_conv_layer(x, edge_index, edge_weight, x0, W=None, b=None,
                            *, use_weight=True, use_init=False, adj=None,
                            tile_m=512, tile_k=2048):
    """Pallas implementation of HeteroGraphConvLayer.forward."""
    N, F_in = x.shape

    # ---- tile sizes (sublane/lane aligned; >= 2 row tiles for v7x megacore) ----
    tile_m = max(16, min(tile_m, _round_up(N, 16)))
    tile_k = max(128, min(tile_k, _round_up(N, 128)))
    if N > 16 and _round_up(N, tile_m) // tile_m < 2:
        tile_m = max(16, _round_up((N + 1) // 2, 16))
    rows_pad = _round_up(N, tile_m)
    cols_pad = _round_up(N, tile_k)

    # ---- normalized dense adjacency (bf16), optionally reused across calls ----
    if adj is None:
        row, col = edge_index[0], edge_index[1]
        d = jnp.zeros((N,), jnp.float32).at[col].add(1.0)      # degree(col, N)
        value = (edge_weight.astype(jnp.float32)
                 * jnp.sqrt(1.0 / d[col]) * jnp.sqrt(1.0 / d[row]))
        value = jnp.nan_to_num(value, nan=0.0, posinf=0.0, neginf=0.0)
        adj_p = (jnp.zeros((rows_pad, cols_pad), jnp.float32)
                 .at[col, row].add(value)).astype(jnp.bfloat16)
    else:
        adj_p = adj.astype(jnp.bfloat16)
        if adj_p.shape != (rows_pad, cols_pad):
            adj_p = jnp.pad(adj_p, ((0, rows_pad - adj_p.shape[0]),
                                    (0, cols_pad - adj_p.shape[1])))

    x_p = jnp.zeros((cols_pad, F_in), jnp.bfloat16).at[:N].set(
        x.astype(jnp.bfloat16))

    f_half = _round_up(F_in, 128)
    if use_init:
        x0_p = jnp.zeros((rows_pad, F_in), jnp.bfloat16).at[:N].set(
            x0.astype(jnp.bfloat16))
        x0_spec = pl.BlockSpec((tile_m, F_in), lambda i, k: (i, 0))
        x0_tile_bytes = tile_m * F_in * 2
    else:
        x0_p = jnp.zeros((16, 128), jnp.bfloat16)               # unused placeholder
        x0_spec = pl.BlockSpec((16, 128), lambda i, k: (0, 0))
        x0_tile_bytes = 16 * 128 * 2

    if use_weight:
        F_out = W.shape[1]
        f_out_pad = _round_up(F_out, 128)
        wa_p = jnp.zeros((F_in, f_out_pad), jnp.float32).at[:, :F_out].set(
            W[:F_in].astype(jnp.float32))
        if use_init:
            wx_p = jnp.zeros((F_in, f_out_pad), jnp.float32).at[:, :F_out].set(
                W[F_in:].astype(jnp.float32))
        else:
            wx_p = jnp.zeros((16, 128), jnp.float32)            # unused placeholder
        b_p = jnp.zeros((1, f_out_pad), jnp.float32).at[:, :F_out].set(
            jnp.asarray(b).reshape(1, -1).astype(jnp.float32))
    else:
        F_out = 2 * F_in if use_init else F_in
        f_out_pad = 2 * f_half if use_init else f_half
        wa_p = jnp.zeros((16, 128), jnp.float32)                # unused placeholders
        wx_p = jnp.zeros((16, 128), jnp.float32)
        b_p = jnp.zeros((1, 128), jnp.float32)

    grid = (rows_pad // tile_m, cols_pad // tile_k)
    n_row_tiles = grid[0]

    kernel = functools.partial(_hetero_gcn_kernel, use_weight=use_weight,
                               use_init=use_init, f_in=F_in, f_half=f_half)

    # ---- scoped-VMEM budget from the double-buffered tile footprint, clamped to
    # the chip's physical VMEM (v7x: 64 MiB/TC) ----
    vmem_bytes = (
        2 * tile_m * tile_k * 2                    # adj tile (bf16), double-buffered
        + 2 * tile_k * F_in * 2                    # x k-tile (bf16), double-buffered
        + 2 * x0_tile_bytes                        # x0 tile (bf16) or placeholder
        + 2 * (wa_p.size + wx_p.size + b_p.size) * 4
        + tile_m * F_in * 4                        # f32 accumulator scratch
        + 2 * tile_m * f_out_pad * x.dtype.itemsize)
    vmem_cap = _vmem_capacity_bytes()
    vmem_limit = int(min(max(2 * vmem_bytes, 16 << 20), vmem_cap - (16 << 20)))
    vmem_limit = max(vmem_limit, vmem_bytes)

    flops = 2 * rows_pad * cols_pad * F_in
    if use_weight:
        flops += 2 * rows_pad * (2 * F_in if use_init else F_in) * f_out_pad
    bytes_accessed = int(
        adj_p.size * 2
        + x_p.size * 2 * n_row_tiles               # x re-read once per row tile
        + (x0_p.size * 2 if use_init else 0)
        + (wa_p.size + wx_p.size + b_p.size) * 4
        + rows_pad * f_out_pad * x.dtype.itemsize)

    out = pl.pallas_call(
        kernel,
        out_shape=jax.ShapeDtypeStruct((rows_pad, f_out_pad), x.dtype),
        grid=grid,
        in_specs=[
            pl.BlockSpec((tile_m, tile_k), lambda i, k: (i, k)),   # adjacency tile
            pl.BlockSpec((tile_k, F_in), lambda i, k: (k, 0)),     # x k-tile
            x0_spec,                                               # x0 (or placeholder)
            pl.BlockSpec(wa_p.shape, lambda i, k: (0, 0)),         # W_agg (resident)
            pl.BlockSpec(wx_p.shape, lambda i, k: (0, 0)),         # W_x0  (resident)
            pl.BlockSpec(b_p.shape, lambda i, k: (0, 0)),          # bias
        ],
        out_specs=pl.BlockSpec((tile_m, f_out_pad), lambda i, k: (i, 0)),
        scratch_shapes=[pltpu.VMEM((tile_m, F_in), jnp.float32)],
        compiler_params=pltpu.CompilerParams(
            dimension_semantics=("parallel", "arbitrary"),
            vmem_limit_bytes=vmem_limit),
        cost_estimate=pl.CostEstimate(
            flops=flops, transcendentals=0, bytes_accessed=bytes_accessed),
    )(adj_p, x_p, x0_p, wa_p, wx_p, b_p)

    if use_weight:
        return out[:N, :F_out]
    if use_init:
        return jnp.concatenate(
            [out[:N, :F_in], out[:N, f_half:f_half + F_in]], axis=1)
    return out[:N, :F_in]


def _reference(x, edge_index, edge_weight, x0, W, b, *, use_weight, use_init,
               match_kernel_dtypes=False):
    """Plain-JAX reference. match_kernel_dtypes mirrors the kernel's intentional
    bf16 quantization of adj / x / x0 (f32 accumulation) for a tight check."""
    N = x.shape[0]
    row, col = edge_index[0], edge_index[1]
    d = jnp.zeros((N,), jnp.float32).at[col].add(1.0)
    value = edge_weight * jnp.sqrt(1.0 / d[col]) * jnp.sqrt(1.0 / d[row])
    value = jnp.nan_to_num(value, nan=0.0, posinf=0.0, neginf=0.0)
    adj = jnp.zeros((N, N), jnp.float32).at[col, row].add(value)
    xx = x.astype(jnp.float32)
    x0x = x0.astype(jnp.float32)
    if match_kernel_dtypes:
        adj = adj.astype(jnp.bfloat16).astype(jnp.float32)
        xx = xx.astype(jnp.bfloat16).astype(jnp.float32)
        if use_init:
            x0x = x0x.astype(jnp.bfloat16).astype(jnp.float32)
    hp = jax.lax.Precision.HIGHEST
    h = jnp.dot(adj, xx, precision=hp)
    if use_init:
        h = jnp.concatenate([h, x0x], axis=1)
    if use_weight:
        h = jnp.dot(h, W, precision=hp) + b
    return h


if __name__ == "__main__":
    # Small, module-consistent shapes: N nodes, E edges, feature dims.
    N, E = 256, 1024
    in_channels, out_channels = 32, 32

    key = jax.random.PRNGKey(0)
    kx, kx0, kei, kew, kw1, kw2, kb = jax.random.split(key, 7)

    x = jax.random.normal(kx, (N, in_channels), jnp.float32)
    x0 = jax.random.normal(kx0, (N, in_channels), jnp.float32)
    edge_index = jax.random.randint(kei, (2, E), 0, N, jnp.int32)
    edge_weight = jax.random.uniform(kew, (E,), jnp.float32)

    # nn.Linear-style init (W stored as [F_in_, F_out] == Linear.weight.T).
    def make_linear(k, fan_in, fan_out):
        bound = 1.0 / (fan_in ** 0.5)
        return jax.random.uniform(k, (fan_in, fan_out), jnp.float32, -bound, bound)

    W1 = make_linear(kw1, in_channels, out_channels)           # use_init=False
    W2 = make_linear(kw2, 2 * in_channels, out_channels)       # use_init=True
    b1 = jax.random.uniform(kb, (1, out_channels), jnp.float32, -0.1, 0.1)

    # Config A: default module config; small explicit tiles so the (rows, K)
    # grid = (2, 2) exercises the K accumulation and the parallel row axis.
    out_a = jax.block_until_ready(hetero_graph_conv_layer(
        x, edge_index, edge_weight, x0, W1, b1,
        use_weight=True, use_init=False, tile_m=128, tile_k=128))
    ref_a = _reference(x, edge_index, edge_weight, x0, W1, b1,
                       use_weight=True, use_init=False, match_kernel_dtypes=True)
    assert out_a.shape == (N, out_channels)
    assert jnp.allclose(out_a, ref_a, rtol=2e-2, atol=2e-2), "mismatch (use_weight)"

    # Config B: use_init path with a prebuilt (reused) adjacency and default
    # (auto-clamped) tiles — exercises the split-weight fused Linear.
    adj_cached = build_normalized_adjacency(edge_index, edge_weight, N)
    out_b = jax.block_until_ready(hetero_graph_conv_layer(
        x, edge_index, edge_weight, x0, W2, b1,
        use_weight=True, use_init=True, adj=adj_cached))
    ref_b = _reference(x, edge_index, edge_weight, x0, W2, b1,
                       use_weight=True, use_init=True, match_kernel_dtypes=True)
    assert out_b.shape == (N, out_channels)
    assert jnp.allclose(out_b, ref_b, rtol=2e-2, atol=2e-2), "mismatch (use_init)"

    # Config C: no Linear — lane-dense split output path.
    out_c = jax.block_until_ready(hetero_graph_conv_layer(
        x, edge_index, edge_weight, x0, None, None,
        use_weight=False, use_init=True))
    ref_c = _reference(x, edge_index, edge_weight, x0, None, None,
                       use_weight=False, use_init=True, match_kernel_dtypes=True)
    assert out_c.shape == (N, 2 * in_channels)
    assert jnp.allclose(out_c, ref_c, rtol=2e-2, atol=2e-2), "mismatch (no weight)"

    print("KERNEL_OK")
</pallas_src>

<mosaic_0001>
module attributes {stable_mosaic.version = 11 : i64} {
  func.func @_hetero_gcn_kernel(%arg0: i32, %arg1: i32, %arg2: memref<128x128xbf16, #tpu.memory_space<vmem>>, %arg3: memref<128x32xbf16, #tpu.memory_space<vmem>>, %arg4: memref<16x128xbf16, #tpu.memory_space<vmem>>, %arg5: memref<32x128xf32, #tpu.memory_space<vmem>>, %arg6: memref<16x128xf32, #tpu.memory_space<vmem>>, %arg7: memref<1x128xf32, #tpu.memory_space<vmem>>, %arg8: memref<128x128xf32, #tpu.memory_space<vmem>>, %arg9: memref<128x32xf32, #tpu.memory_space<vmem>>) attributes {dimension_semantics = [#tpu.dimension_semantics<parallel>, #tpu.dimension_semantics<arbitrary>], iteration_bounds = array<i64: 2, 2>, scalar_prefetch = 0 : i64, scratch_operands = 1 : i64, tpu.core_type = #tpu.core_type<tc>, window_params = [{transform_indices = @transform_0, window_bounds = array<i64: 128, 128>}, {transform_indices = @transform_1, window_bounds = array<i64: 128, 32>}, {pipeline_mode = #tpu.pipeline_mode<synchronous>, transform_indices = @transform_2, window_bounds = array<i64: 16, 128>}, {pipeline_mode = #tpu.pipeline_mode<synchronous>, transform_indices = @transform_3, window_bounds = array<i64: 32, 128>}, {pipeline_mode = #tpu.pipeline_mode<synchronous>, transform_indices = @transform_4, window_bounds = array<i64: 16, 128>}, {pipeline_mode = #tpu.pipeline_mode<synchronous>, transform_indices = @transform_5, window_bounds = array<i64: 1, 128>}, {transform_indices = @transform_6, window_bounds = array<i64: 128, 128>}]} {
    %c0_i32 = arith.constant 0 : i32
    %0 = arith.cmpi eq, %arg1, %c0_i32 : i32
    %1 = arith.extui %0 : i1 to i32
    %c0_i32_0 = arith.constant 0 : i32
    %2 = arith.cmpi ne, %1, %c0_i32_0 : i32
    scf.if %2 {
      %cst_9 = arith.constant 0.000000e+00 : f32
      %12 = vector.broadcast %cst_9 : f32 to vector<128x32xf32>
      %c0_10 = arith.constant 0 : index
      %c0_11 = arith.constant 0 : index
      %13 = vector.load %arg9[%c0_10, %c0_11] : memref<128x32xf32, #tpu.memory_space<vmem>>, vector<128x32xf32>
      tpu.vector_store %arg9[%c0_10, %c0_11], %12 {strides = array<i32>} : memref<128x32xf32, #tpu.memory_space<vmem>>, vector<128x32xf32>,
    } else {
    }
    %c0 = arith.constant 0 : index
    %c0_1 = arith.constant 0 : index
    %3 = vector.load %arg9[%c0, %c0_1] : memref<128x32xf32, #tpu.memory_space<vmem>>, vector<128x32xf32>
    %c0_2 = arith.constant 0 : index
    %c0_3 = arith.constant 0 : index
    %4 = vector.load %arg2[%c0_2, %c0_3] : memref<128x128xbf16, #tpu.memory_space<vmem>>, vector<128x128xbf16>
    %c0_4 = arith.constant 0 : index
    %c0_5 = arith.constant 0 : index
    %5 = vector.load %arg3[%c0_4, %c0_5] : memref<128x32xbf16, #tpu.memory_space<vmem>>, vector<128x32xbf16>
    %cst = arith.constant dense<0.000000e+00> : vector<128x32xf32>
    %6 = tpu.matmul %4, %5, %cst {dimension_numbers = #tpu.dot_dimension_numbers<[1], [0], [0], [1], [0, 0, 1, 1], [], []>} : vector<128x128xbf16>, vector<128x32xbf16>, vector<128x32xf32> -> vector<128x32xf32>
    %7 = arith.addf %3, %6 : vector<128x32xf32>
    %c0_6 = arith.constant 0 : index
    %c0_7 = arith.constant 0 : index
    %8 = vector.load %arg9[%c0_6, %c0_7] : memref<128x32xf32, #tpu.memory_space<vmem>>, vector<128x32xf32>
    tpu.vector_store %arg9[%c0_6, %c0_7], %7 {strides = array<i32>} : memref<128x32xf32, #tpu.memory_space<vmem>>, vector<128x32xf32>,
    %c1_i32 = arith.constant 1 : i32
    %9 = arith.cmpi eq, %arg1, %c1_i32 : i32
    %10 = arith.extui %9 : i1 to i32
    %c0_i32_8 = arith.constant 0 : i32
    %11 = arith.cmpi ne, %10, %c0_i32_8 : i32
    scf.if %11 {
      %c0_9 = arith.constant 0 : index
      %c0_10 = arith.constant 0 : index
      %12 = vector.load %arg9[%c0_9, %c0_10] : memref<128x32xf32, #tpu.memory_space<vmem>>, vector<128x32xf32>
      %c0_11 = arith.constant 0 : index
      %c0_12 = arith.constant 0 : index
      %13 = vector.load %arg5[%c0_11, %c0_12] : memref<32x128xf32, #tpu.memory_space<vmem>>, vector<32x128xf32>
      %cst_13 = arith.constant dense<0.000000e+00> : vector<128x128xf32>
      %14 = tpu.matmul %12, %13, %cst_13 {dimension_numbers = #tpu.dot_dimension_numbers<[1], [0], [0], [1], [0, 0, 1, 1], [], []>} : vector<128x32xf32>, vector<32x128xf32>, vector<128x128xf32> -> vector<128x128xf32>
      %c0_14 = arith.constant 0 : index
      %c0_15 = arith.constant 0 : index
      %15 = vector.load %arg7[%c0_14, %c0_15] : memref<1x128xf32, #tpu.memory_space<vmem>>, vector<1x128xf32>
      %16 = vector.broadcast %15 : vector<1x128xf32> to vector<128x128xf32>
      %17 = arith.addf %14, %16 : vector<128x128xf32>
      %c0_16 = arith.constant 0 : index
      %c0_17 = arith.constant 0 : index
      %18 = vector.load %arg8[%c0_16, %c0_17] : memref<128x128xf32, #tpu.memory_space<vmem>>, vector<128x128xf32>
      tpu.vector_store %arg8[%c0_16, %c0_17], %17 {strides = array<i32>} : memref<128x128xf32, #tpu.memory_space<vmem>>, vector<128x128xf32>,
    } else {
    }
    return
  }
  func.func @transform_0(%arg0: i32, %arg1: i32) -> (i32, i32) {
    %c0_i32 = arith.constant 0 : i32
    return %arg0, %arg1 : i32, i32
  }
  func.func @transform_1(%arg0: i32, %arg1: i32) -> (i32, i32) {
    %c0_i32 = arith.constant 0 : i32
    %c0_i32_0 = arith.constant 0 : i32
    return %arg1, %c0_i32 : i32, i32
  }
  func.func @transform_2(%arg0: i32, %arg1: i32) -> (i32, i32) {
    %c0_i32 = arith.constant 0 : i32
    %c0_i32_0 = arith.constant 0 : i32
    %c0_i32_1 = arith.constant 0 : i32
    return %c0_i32, %c0_i32_0 : i32, i32
  }
  func.func @transform_3(%arg0: i32, %arg1: i32) -> (i32, i32) {
    %c0_i32 = arith.constant 0 : i32
    %c0_i32_0 = arith.constant 0 : i32
    %c0_i32_1 = arith.constant 0 : i32
    return %c0_i32, %c0_i32_0 : i32, i32
  }
  func.func @transform_4(%arg0: i32, %arg1: i32) -> (i32, i32) {
    %c0_i32 = arith.constant 0 : i32
    %c0_i32_0 = arith.constant 0 : i32
    %c0_i32_1 = arith.constant 0 : i32
    return %c0_i32, %c0_i32_0 : i32, i32
  }
  func.func @transform_5(%arg0: i32, %arg1: i32) -> (i32, i32) {
    %c0_i32 = arith.constant 0 : i32
    %c0_i32_0 = arith.constant 0 : i32
    %c0_i32_1 = arith.constant 0 : i32
    return %c0_i32, %c0_i32_0 : i32, i32
  }
  func.func @transform_6(%arg0: i32, %arg1: i32) -> (i32, i32) {
    %c0_i32 = arith.constant 0 : i32
    %c0_i32_0 = arith.constant 0 : i32
    return %arg0, %c0_i32 : i32, i32
  }
}

</mosaic_0001>

<llo_original>
// kernel: tpu_custom_call.1
$region0: #{tpu_custom_call.1}
  #allocation0 [shape = 'u32[]', space=smem, size = 0x4, offset = 0x4, fixed_abs, tag = 'smem constant byte address 0x4 - core index']
  #allocation1 [shape = 'u32[144,128]{1,0:T(1,128)}', space=vmem, size = 0x12000, scoped, tag = 'internal scratch']
  #allocation2 [shape = 'f32[128,32]{1,0:T(8,128)}', space=vmem, size = 0x10000, scoped, tag = 'scratch operand']
  %s0 = inlined_call_operand.hbm [shape: bf16[256,256], index: 0, kind: input, shape index: {}]
  %s1 = inlined_call_operand.vmem [shape: bf16[256,32], index: 1, kind: input, shape index: {}]
  %s2 = inlined_call_operand.vmem [shape: bf16[16,128], index: 2, kind: input, shape index: {}]
  %s3 = inlined_call_operand.vmem [shape: f32[32,128], index: 3, kind: input, shape index: {}]
  %s4 = inlined_call_operand.vmem [shape: f32[16,128], index: 4, kind: input, shape index: {}]
  %s5 = inlined_call_operand.vmem [shape: f32[1,128], index: 5, kind: input, shape index: {}]
  %s6 = inlined_call_operand.hbm [shape: f32[256,128], index: 6, kind: output, shape index: {}]
  %s7 = sld [smem:[#allocation0]]
  $region69: #{tpu_custom_call.1} parent=0
    _
  %s9 = ssub.s32 1, %s7
  %s10 = scalar_select 0, %s9, %s7
  $region1: #{tpu_custom_call.1} parent=0
    #allocation3 [shape = 'u8[65536]{0}', space=vmem, size = 0x10000, scoped, tag = 'input window, operand 0']
    #allocation4 [shape = 's32[2]{0}', space=sflag, size = 0x8, scoped, tag = 'scoped memory for tpu_custom_call.1']
    #allocation5 [shape = 's32[2]{0}', space=sflag, size = 0x8, scoped, tag = 'scoped memory for tpu_custom_call.1']
    #allocation6 [shape = 'u8[131072]{0}', space=vmem, size = 0x20000, scoped, tag = 'output window, operand 0']
    %11 = vsyncpa [#allocation4], 0
    %s12 = scalar_lea.sflag [#allocation4], 1
    %13 = vsyncpa %s12, 0
    %14 = vsyncpa [#allocation5], 0
    %s15 = scalar_lea.sflag [#allocation5], 1
    %16 = vsyncpa %s15, 0
    loop: start=0, step=1, limit=6
    $region2: #{tpu_custom_call.1} parent=1 // loop_pre_header
      _
    $region3: #{tpu_custom_call.1} parent=1 // loop_header
      %s18 = sphi 0, %s22
      %p19 = scmp.ge.s32.totalorder %s18, 6
      %s25 = sphi 0, %s37
      %s26 = sphi 0, %s33
      %s27 = sphi 0, %s25
      %s28 = sphi 0, %s26
      %s29 = sphi 0, %s27
      %s30 = sphi 0, %s28
      %s42 = sphi 0, %s44
      %s45 = sphi 0, %s42
      %s46 = sphi 0, %s45
      %s62 = sphi 0, %s46
      %s68 = sphi 0, %s70
      %s71 = sphi 0, %s68
      %s72 = sphi 0, %s71
      %s88 = sphi 0, %s72
      %s92 = sphi 0, %s92
      %s94 = sphi 0, %s92
      %s95 = sphi 0, %s94
      %s109 = sphi 0, %s95
      %s113 = sphi 0, %s113
      %s115 = sphi 0, %s113
      %s116 = sphi 0, %s115
      %s130 = sphi 0, %s116
      %s134 = sphi 0, %s134
      %s136 = sphi 0, %s134
      %s137 = sphi 0, %s136
      %s151 = sphi 0, %s137
      %s155 = sphi 0, %s155
      %s157 = sphi 0, %s155
      %s158 = sphi 0, %s157
      %s172 = sphi 0, %s158
      %s178 = sphi 0, %s180
      %s181 = sphi 0, %s178
      %s182 = sphi 0, %s181
      %s198 = sphi 0, %s182
    $region4: #{tpu_custom_call.1} parent=1 // loop_header_branch
      %21 = sbr.rel (%p19) target = $region8
    $region5: #{tpu_custom_call.1} parent=1 // loop_body
      %s23 = ssub.s32 %s18, 1
      %s24 = ssub.s32 %s18, 2
      %s31 = sadd.s32 1, %s26
      %p32 = scmp.ge.s32.totalorder %s31, 2
      %s33 = scalar_select %p32, 0, %s31
      %s34 = sadd.s32 1, %s25
      %s35 = scalar_select %p32, %s34, %s25
      %p36 = scmp.ge.s32.totalorder %s35, 2
      %s37 = scalar_select %p36, 0, %s35
      %s38 = ssub.s32 %s25, %s37
      %s39 = ssub.s32 %s26, %s33
      %s40 = sor.u32 %s38, %s39
      %p41 = scmp.eq.s32.totalorder %s40, 0
      %s43 = sadd.s32 %s42, 1
      %s44 = scalar_select %p41, %s42, %s43
      %p47 = pneg %p41
      %p48 = scmp.eq.s32.totalorder %s18, 3
      %p49 = por %p47, %p48
      %p50 = scmp.ne.s32.totalorder %s42, %s45
      %p51 = scmp.eq.s32.totalorder %s18, 0
      %p52 = por %p50, %p51
      %p53 = scmp.ne.s32.totalorder %s42, %s45
      %p54 = scmp.eq.s32.totalorder %s23, 3
      %p55 = por %p53, %p54
      %p56 = scmp.ne.s32.totalorder %s45, %s46
      %p57 = scmp.eq.s32.totalorder %s23, 0
      %p58 = por %p56, %p57
      %p59 = scmp.ne.s32.totalorder %s45, %s46
      %p60 = scmp.eq.s32.totalorder %s24, 3
      %p61 = por %p59, %p60
      %p63 = scmp.ne.s32.totalorder %s46, %s62
      %p64 = scmp.eq.s32.totalorder %s24, 0
      %p65 = por %p63, %p64
      %s66 = ssub.s32 %s26, %s33
      %p67 = scmp.eq.s32.totalorder %s66, 0
      %s69 = sadd.s32 %s68, 1
      %s70 = scalar_select %p67, %s68, %s69
      %p73 = pneg %p67
      %p74 = scmp.eq.s32.totalorder %s18, 3
      %p75 = por %p73, %p74
      %p76 = scmp.ne.s32.totalorder %s68, %s71
      %p77 = scmp.eq.s32.totalorder %s18, 0
      %p78 = por %p76, %p77
      %p79 = scmp.ne.s32.totalorder %s68, %s71
      %p80 = scmp.eq.s32.totalorder %s23, 3
      %p81 = por %p79, %p80
      %p82 = scmp.ne.s32.totalorder %s71, %s72
      %p83 = scmp.eq.s32.totalorder %s23, 0
      %p84 = por %p82, %p83
      %p85 = scmp.ne.s32.totalorder %s71, %s72
      %p86 = scmp.eq.s32.totalorder %s24, 3
      %p87 = por %p85, %p86
      %p89 = scmp.ne.s32.totalorder %s72, %s88
      %p90 = scmp.eq.s32.totalorder %s24, 0
      %p91 = por %p89, %p90
      %s93 = sadd.s32 %s92, 1
      %p96 = scmp.eq.s32.totalorder %s18, 3
      %p97 = scmp.ne.s32.totalorder %s92, %s94
      %p98 = scmp.eq.s32.totalorder %s18, 0
      %p99 = por %p97, %p98
      %p100 = scmp.ne.s32.totalorder %s92, %s94
      %p101 = scmp.eq.s32.totalorder %s23, 3
      %p102 = por %p100, %p101
      %p103 = scmp.ne.s32.totalorder %s94, %s95
      %p104 = scmp.eq.s32.totalorder %s23, 0
      %p105 = por %p103, %p104
      %p106 = scmp.ne.s32.totalorder %s94, %s95
      %p107 = scmp.eq.s32.totalorder %s24, 3
      %p108 = por %p106, %p107
      %p110 = scmp.ne.s32.totalorder %s95, %s109
      %p111 = scmp.eq.s32.totalorder %s24, 0
      %p112 = por %p110, %p111
      %s114 = sadd.s32 %s113, 1
      %p117 = scmp.eq.s32.totalorder %s18, 3
      %p118 = scmp.ne.s32.totalorder %s113, %s115
      %p119 = scmp.eq.s32.totalorder %s18, 0
      %p120 = por %p118, %p119
      %p121 = scmp.ne.s32.totalorder %s113, %s115
      %p122 = scmp.eq.s32.totalorder %s23, 3
      %p123 = por %p121, %p122
      %p124 = scmp.ne.s32.totalorder %s115, %s116
      %p125 = scmp.eq.s32.totalorder %s23, 0
      %p126 = por %p124, %p125
      %p127 = scmp.ne.s32.totalorder %s115, %s116
      %p128 = scmp.eq.s32.totalorder %s24, 3
      %p129 = por %p127, %p128
      %p131 = scmp.ne.s32.totalorder %s116, %s130
      %p132 = scmp.eq.s32.totalorder %s24, 0
      %p133 = por %p131, %p132
      %s135 = sadd.s32 %s134, 1
      %p138 = scmp.eq.s32.totalorder %s18, 3
      %p139 = scmp.ne.s32.totalorder %s134, %s136
      %p140 = scmp.eq.s32.totalorder %s18, 0
      %p141 = por %p139, %p140
      %p142 = scmp.ne.s32.totalorder %s134, %s136
      %p143 = scmp.eq.s32.totalorder %s23, 3
      %p144 = por %p142, %p143
      %p145 = scmp.ne.s32.totalorder %s136, %s137
      %p146 = scmp.eq.s32.totalorder %s23, 0
      %p147 = por %p145, %p146
      %p148 = scmp.ne.s32.totalorder %s136, %s137
      %p149 = scmp.eq.s32.totalorder %s24, 3
      %p150 = por %p148, %p149
      %p152 = scmp.ne.s32.totalorder %s137, %s151
      %p153 = scmp.eq.s32.totalorder %s24, 0
      %p154 = por %p152, %p153
      %s156 = sadd.s32 %s155, 1
      %p159 = scmp.eq.s32.totalorder %s18, 3
      %p160 = scmp.ne.s32.totalorder %s155, %s157
      %p161 = scmp.eq.s32.totalorder %s18, 0
      %p162 = por %p160, %p161
      %p163 = scmp.ne.s32.totalorder %s155, %s157
      %p164 = scmp.eq.s32.totalorder %s23, 3
      %p165 = por %p163, %p164
      %p166 = scmp.ne.s32.totalorder %s157, %s158
      %p167 = scmp.eq.s32.totalorder %s23, 0
      %p168 = por %p166, %p167
      %p169 = scmp.ne.s32.totalorder %s157, %s158
      %p170 = scmp.eq.s32.totalorder %s24, 3
      %p171 = por %p169, %p170
      %p173 = scmp.ne.s32.totalorder %s158, %s172
      %p174 = scmp.eq.s32.totalorder %s24, 0
      %p175 = por %p173, %p174
      %s176 = ssub.s32 %s25, %s37
      %p177 = scmp.eq.s32.totalorder %s176, 0
      %s179 = sadd.s32 %s178, 1
      %s180 = scalar_select %p177, %s178, %s179
      %p183 = pneg %p177
      %p184 = scmp.eq.s32.totalorder %s18, 3
      %p185 = por %p183, %p184
      %p186 = scmp.ne.s32.totalorder %s178, %s181
      %p187 = scmp.eq.s32.totalorder %s18, 0
      %p188 = por %p186, %p187
      %p189 = scmp.ne.s32.totalorder %s178, %s181
      %p190 = scmp.eq.s32.totalorder %s23, 3
      %p191 = por %p189, %p190
      %p192 = scmp.ne.s32.totalorder %s181, %s182
      %p193 = scmp.eq.s32.totalorder %s23, 0
      %p194 = por %p192, %p193
      %p195 = scmp.ne.s32.totalorder %s181, %s182
      %p196 = scmp.eq.s32.totalorder %s24, 3
      %p197 = por %p195, %p196
      %p199 = scmp.ne.s32.totalorder %s182, %s198
      %p200 = scmp.eq.s32.totalorder %s24, 0
      %p201 = por %p199, %p200
      %p202 = scmp.le.s32.totalorder 1, %s18
      %p203 = scmp.lt.s32.totalorder %s18, 5
      %p204 = pnand %p202, %p203
      %p205 = pneg %p204
      // Predicated region
      $region9: #{tpu_custom_call.1} parent=5 // pred_check
        _
      $region10: #{tpu_custom_call.1} parent=5 // pred_check_branch
        %207 = sbr.rel (%p204) target = $region12
      $region11: #{tpu_custom_call.1} parent=5 // pred_region
        %s208 = ssub.s32 %s18, 1
        // Predicated region
        $region13: #{tpu_custom_call.1} parent=11 // pred_check
          %p209 = pneg %p105
        $region14: #{tpu_custom_call.1} parent=11 // pred_check_branch
          %211 = sbr.rel (%p209) target = $region16
        $region15: #{tpu_custom_call.1} parent=11 // pred_region
          _
        $region16: #{tpu_custom_call.1} parent=11 // pred_fallthru
          _
        // Predicated region
        $region17: #{tpu_custom_call.1} parent=11 // pred_check
          %p212 = pneg %p126
        $region18: #{tpu_custom_call.1} parent=11 // pred_check_branch
          %214 = sbr.rel (%p212) target = $region20
        $region19: #{tpu_custom_call.1} parent=11 // pred_region
          _
        $region20: #{tpu_custom_call.1} parent=11 // pred_fallthru
          _
        // Predicated region
        $region21: #{tpu_custom_call.1} parent=11 // pred_check
          %p215 = pneg %p147
        $region22: #{tpu_custom_call.1} parent=11 // pred_check_branch
          %217 = sbr.rel (%p215) target = $region24
        $region23: #{tpu_custom_call.1} parent=11 // pred_region
          _
        $region24: #{tpu_custom_call.1} parent=11 // pred_fallthru
          _
        // Predicated region
        $region25: #{tpu_custom_call.1} parent=11 // pred_check
          %p218 = pneg %p168
        $region26: #{tpu_custom_call.1} parent=11 // pred_check_branch
          %220 = sbr.rel (%p218) target = $region28
        $region27: #{tpu_custom_call.1} parent=11 // pred_region
          _
        $region28: #{tpu_custom_call.1} parent=11 // pred_fallthru
          _
      $region12: #{tpu_custom_call.1} parent=5 // pred_fallthru
        _
      %p221 = scmp.lt.s32.totalorder %s18, 4
      // Predicated region
      $region29: #{tpu_custom_call.1} parent=5 // pred_check
        %p222 = pneg %p221
      $region30: #{tpu_custom_call.1} parent=5 // pred_check_branch
        %224 = sbr.rel (%p222) target = $region32
      $region31: #{tpu_custom_call.1} parent=5 // pred_region
        // Predicated region
        $region33: #{tpu_custom_call.1} parent=31 // pred_check
          %p225 = pneg %p52
        $region34: #{tpu_custom_call.1} parent=31 // pred_check_branch
          %227 = sbr.rel (%p225) target = $region36
        $region35: #{tpu_custom_call.1} parent=31 // pred_region
          %s228 = sand.u32 %s42, 1
          %s229 = scalar_lea.sflag [#allocation4], %s228
          %s230 = sand.u32 %s42, 1
          %s231 = smul.addr %s230, 64
          %s232 = scalar_lea.vmem [#allocation3], %s231
          %s233 = smul.u32 16, %s25
          %s235 = ssub.s32 1024, 1024
          %236 = vsyncadd %s229, %s235
          %s237 = smul.addr %s233, 2
          %s238 = sadd.s32 %s26, %s237
          %s239 = smul.addr %s238, 64
          %s240 = scalar_lea.hbm %s0, %s239
          %s241 = sshll.u32 %s232, 4
          %s242 = int_to_ptr.vmem [resolvable:$true] %s241
          %247 = dma.hbm_to_vmem [thread:$0]  %s240, 1024, %s242, %s229, 128, 64, 4
        $region36: #{tpu_custom_call.1} parent=31 // pred_fallthru
          _
        // Predicated region
        $region37: #{tpu_custom_call.1} parent=31 // pred_check
          %p248 = pneg %p78
        $region38: #{tpu_custom_call.1} parent=31 // pred_check_branch
          %250 = sbr.rel (%p248) target = $region40
        $region39: #{tpu_custom_call.1} parent=31 // pred_region
          %s251 = smul.u32 16, %s26
          %p252 = scmp.lt.s32.totalorder %s251, 31
          %s253 = scalar_select %p252, %s251, 31
          %s254 = smul.addr %s253, 4
          %s255 = scalar_lea.vmem %s1, %s254
          %s256 = smul.u32 16, %s26
        $region40: #{tpu_custom_call.1} parent=31 // pred_fallthru
          _
      $region32: #{tpu_custom_call.1} parent=5 // pred_fallthru
        _
      %p257 = scmp.le.s32.totalorder 1, %s18
      %p258 = scmp.lt.s32.totalorder %s18, 5
      %p259 = pnand %p257, %p258
      %p260 = pneg %p259
      // Predicated region
      $region41: #{tpu_custom_call.1} parent=5 // pred_check
        _
      $region42: #{tpu_custom_call.1} parent=5 // pred_check_branch
        %262 = sbr.rel (%p259) target = $region44
      $region43: #{tpu_custom_call.1} parent=5 // pred_region
        %s263 = ssub.s32 %s18, 1
        %s264 = sand.u32 %s45, 1
        %s265 = scalar_lea.sflag [#allocation4], %s264
        %s266 = sand.u32 %s45, 1
        %s267 = smul.addr %s266, 64
        %s268 = scalar_lea.vmem [#allocation3], %s267
        // Predicated region
        $region45: #{tpu_custom_call.1} parent=43 // pred_check
          %p269 = pneg %p58
        $region46: #{tpu_custom_call.1} parent=43 // pred_check_branch
          %271 = sbr.rel (%p269) target = $region48
        $region47: #{tpu_custom_call.1} parent=43 // pred_region
          %272 = dma.done %s265, 1024
        $region48: #{tpu_custom_call.1} parent=43 // pred_fallthru
          _
        %s273 = sand.u32 %s45, 1
        %s274 = scalar_lea.sflag [#allocation4], %s273
        %s275 = sand.u32 %s45, 1
        %s276 = smul.addr %s275, 64
        %s277 = scalar_lea.vmem [#allocation3], %s276
        %p278 = pneg %p58
        %p279 = pneg %p55
        %s280 = smul.u32 16, %s28
        %p281 = scmp.lt.s32.totalorder %s280, 31
        %s282 = scalar_select %p281, %s280, 31
        %s283 = smul.addr %s282, 4
        %s284 = scalar_lea.vmem %s1, %s283
        %p285 = pneg %p84
        %p286 = pneg %p81
        %p287 = pneg %p105
        %p288 = pneg %p102
        %p289 = pneg %p126
        %p290 = pneg %p123
        %p291 = pneg %p147
        %p292 = pneg %p144
        %p293 = pneg %p168
        %p294 = pneg %p165
        %p295 = pneg %p194
        %p296 = pneg %p191
        %s297 = sand.u32 %s181, 1
        %s298 = scalar_lea.sflag [#allocation5], %s297
        %s299 = sand.u32 %s181, 1
        %s300 = smul.addr %s299, 128
        %s301 = scalar_lea.vmem [#allocation6], %s300
        %s302 = smul.u32 16, %s27
        %s303 = smul.u32 16, %s28
        %p304 = scmp.lt.s32.totalorder %s303, 31
        %s305 = scalar_select %p304, %s303, 31
        %s306 = smul.addr %s305, 4
        %s307 = scalar_lea.vmem %s1, %s306
        %s308 = smul.u32 16, %s28
        %s309 = smul.u32 16, %s27
        %p311 = scmp.eq.s32.totalorder %s28, 0
        // Predicated region
        $region49: #{tpu_custom_call.1} parent=43 // pred_check
          %p312 = pneg %p311
        $region50: #{tpu_custom_call.1} parent=43 // pred_check_branch
          %314 = sbr.rel (%p312) target = $region52
        $region51: #{tpu_custom_call.1} parent=43 // pred_region
          %vm315 = vcmask 261120
          %316 = vst.msk [vmem:[#allocation2] sm:$0xff] %vm315, 0.0
          %317 = vst.msk [vmem:[#allocation2 + $0x8] sm:$0xff] %vm315, 0.0
          %318 = vst.msk [vmem:[#allocation2 + $0x10] sm:$0xff] %vm315, 0.0
          %319 = vst.msk [vmem:[#allocation2 + $0x18] sm:$0xff] %vm315, 0.0
          %320 = vst.msk [vmem:[#allocation2 + $0x20] sm:$0xff] %vm315, 0.0
          %321 = vst.msk [vmem:[#allocation2 + $0x28] sm:$0xff] %vm315, 0.0
          %322 = vst.msk [vmem:[#allocation2 + $0x30] sm:$0xff] %vm315, 0.0
          %323 = vst.msk [vmem:[#allocation2 + $0x38] sm:$0xff] %vm315, 0.0
          %324 = vst.msk [vmem:[#allocation2 + $0x40] sm:$0xff] %vm315, 0.0
          %325 = vst.msk [vmem:[#allocation2 + $0x48] sm:$0xff] %vm315, 0.0
          %326 = vst.msk [vmem:[#allocation2 + $0x50] sm:$0xff] %vm315, 0.0
          %327 = vst.msk [vmem:[#allocation2 + $0x58] sm:$0xff] %vm315, 0.0
          %328 = vst.msk [vmem:[#allocation2 + $0x60] sm:$0xff] %vm315, 0.0
          %329 = vst.msk [vmem:[#allocation2 + $0x68] sm:$0xff] %vm315, 0.0
          %330 = vst.msk [vmem:[#allocation2 + $0x70] sm:$0xff] %vm315, 0.0
          %331 = vst.msk [vmem:[#allocation2 + $0x78] sm:$0xff] %vm315, 0.0
        $region52: #{tpu_custom_call.1} parent=43 // pred_fallthru
          _
        %v332 = vld [vmem:[#allocation2] sm:$0xff]
        %v333 = vld [vmem:[#allocation2 + $0x8] sm:$0xff]
        %v334 = vld [vmem:[#allocation2 + $0x10] sm:$0xff]
        %v335 = vld [vmem:[#allocation2 + $0x18] sm:$0xff]
        %v336 = vld [vmem:[#allocation2 + $0x20] sm:$0xff]
        %v337 = vld [vmem:[#allocation2 + $0x28] sm:$0xff]
        %v338 = vld [vmem:[#allocation2 + $0x30] sm:$0xff]
        %v339 = vld [vmem:[#allocation2 + $0x38] sm:$0xff]
        %v340 = vld [vmem:[#allocation2 + $0x40] sm:$0xff]
        %v341 = vld [vmem:[#allocation2 + $0x48] sm:$0xff]
        %v342 = vld [vmem:[#allocation2 + $0x50] sm:$0xff]
        %v343 = vld [vmem:[#allocation2 + $0x58] sm:$0xff]
        %v344 = vld [vmem:[#allocation2 + $0x60] sm:$0xff]
        %v345 = vld [vmem:[#allocation2 + $0x68] sm:$0xff]
        %v346 = vld [vmem:[#allocation2 + $0x70] sm:$0xff]
        %v347 = vld [vmem:[#allocation2 + $0x78] sm:$0xff]
        %v348 = vld [vmem:[%s268] sm:$0xf]
        %v349 = vld [vmem:[%s268 + $0x4] sm:$0xf]
        %v350 = vld [vmem:[%s268 + $0x8] sm:$0xf]
        %v351 = vld [vmem:[%s268 + $0xc] sm:$0xf]
        %v352 = vld [vmem:[%s268 + $0x10] sm:$0xf]
        %v353 = vld [vmem:[%s268 + $0x14] sm:$0xf]
        %v354 = vld [vmem:[%s268 + $0x18] sm:$0xf]
        %v355 = vld [vmem:[%s268 + $0x1c] sm:$0xf]
        %v356 = vld [vmem:[%s268 + $0x20] sm:$0xf]
        %v357 = vld [vmem:[%s268 + $0x24] sm:$0xf]
        %v358 = vld [vmem:[%s268 + $0x28] sm:$0xf]
        %v359 = vld [vmem:[%s268 + $0x2c] sm:$0xf]
        %v360 = vld [vmem:[%s268 + $0x30] sm:$0xf]
        %v361 = vld [vmem:[%s268 + $0x34] sm:$0xf]
        %v362 = vld [vmem:[%s268 + $0x38] sm:$0xf]
        %v363 = vld [vmem:[%s268 + $0x3c] sm:$0xf]
        %v364 = vld [vmem:[%s307] sm:$0xf]
        %v365 = vld [vmem:[%s307 + $0x4] sm:$0xf]
        %v366 = vld [vmem:[%s307 + $0x8] sm:$0xf]
        %v367 = vld [vmem:[%s307 + $0xc] sm:$0xf]
        %v368 = vld [vmem:[%s307 + $0x10] sm:$0xf]
        %v369 = vld [vmem:[%s307 + $0x14] sm:$0xf]
        %v370 = vld [vmem:[%s307 + $0x18] sm:$0xf]
        %v371 = vld [vmem:[%s307 + $0x1c] sm:$0xf]
        %v372 = vld [vmem:[%s307 + $0x20] sm:$0xf]
        %v373 = vld [vmem:[%s307 + $0x24] sm:$0xf]
        %v374 = vld [vmem:[%s307 + $0x28] sm:$0xf]
        %v375 = vld [vmem:[%s307 + $0x2c] sm:$0xf]
        %v376 = vld [vmem:[%s307 + $0x30] sm:$0xf]
        %v377 = vld [vmem:[%s307 + $0x34] sm:$0xf]
        %v378 = vld [vmem:[%s307 + $0x38] sm:$0xf]
        %v379 = vld [vmem:[%s307 + $0x3c] sm:$0xf]
        %v396 = vunpack.c.l.b16 %v348
        %v397 = vunpack.c.l.b16 %v349
        %v398 = vunpack.c.l.b16 %v350
        %v399 = vunpack.c.l.b16 %v351
        %v400 = vunpack.c.l.b16 %v352
        %v401 = vunpack.c.l.b16 %v353
        %v402 = vunpack.c.l.b16 %v354
        %v403 = vunpack.c.l.b16 %v355
        %v404 = vunpack.c.l.b16 %v356
        %v405 = vunpack.c.l.b16 %v357
        %v406 = vunpack.c.l.b16 %v358
        %v407 = vunpack.c.l.b16 %v359
        %v408 = vunpack.c.l.b16 %v360
        %v409 = vunpack.c.l.b16 %v361
        %v410 = vunpack.c.l.b16 %v362
        %v411 = vunpack.c.l.b16 %v363
        %v412 = vpack.c.b16 %v397, %v396
        %v413 = vpack.c.b16 %v399, %v398
        %v414 = vpack.c.b16 %v401, %v400
        %v415 = vpack.c.b16 %v403, %v402
        %v416 = vpack.c.b16 %v405, %v404
        %v417 = vpack.c.b16 %v407, %v406
        %v418 = vpack.c.b16 %v409, %v408
        %v419 = vpack.c.b16 %v411, %v410
        %v444 = vunpack.c.l.b16 %v364
        %v445 = vunpack.c.l.b16 %v365
        %v446 = vunpack.c.l.b16 %v366
        %v447 = vunpack.c.l.b16 %v367
        %v448 = vunpack.c.l.b16 %v368
        %v449 = vunpack.c.l.b16 %v369
        %v450 = vunpack.c.l.b16 %v370
        %v451 = vunpack.c.l.b16 %v371
        %v452 = vunpack.c.l.b16 %v372
        %v453 = vunpack.c.l.b16 %v373
        %v454 = vunpack.c.l.b16 %v374
        %v455 = vunpack.c.l.b16 %v375
        %v456 = vunpack.c.l.b16 %v376
        %v457 = vunpack.c.l.b16 %v377
        %v458 = vunpack.c.l.b16 %v378
        %v459 = vunpack.c.l.b16 %v379
        %v460 = vpack.c.b16 %v445, %v444
        %v461 = vpack.c.b16 %v447, %v446
        %v462 = vpack.c.b16 %v449, %v448
        %v463 = vpack.c.b16 %v451, %v450
        %v464 = vpack.c.b16 %v453, %v452
        %v465 = vpack.c.b16 %v455, %v454
        %v466 = vpack.c.b16 %v457, %v456
        %v467 = vpack.c.b16 %v459, %v458
        %476 = vmatprep.subr.bf16.mxu0 0
        %477 = vmatpush1.bf16.msra.mxu0 %v460
        %478 = vmatprep.subr.bf16.mxu0 0
        %479 = vmatpush1.bf16.msra.mxu0 %v461
        %480 = vmatprep.subr.bf16.mxu0 0
        %481 = vmatpush1.bf16.msra.mxu0 %v462
        %482 = vmatprep.subr.bf16.mxu0 0
        %483 = vmatpush1.bf16.msra.mxu0 %v463
        %484 = vmatprep.subr.bf16.mxu0 0
        %485 = vmatpush1.bf16.msra.mxu0 %v464
        %486 = vmatprep.subr.bf16.mxu0 0
        %487 = vmatpush1.bf16.msra.mxu0 %v465
        %488 = vmatprep.subr.bf16.mxu0 0
        %489 = vmatpush1.bf16.msra.mxu0 %v466
        %490 = vmatprep.subr.bf16.mxu0 0
        %491 = vmatpush1.bf16.msra.mxu0 %v467
        %492 = vmatprep.subr.bf16.mxu0 0
        %493 = vmatpush1.bf16.msra.mxu0 0
        %494 = vmatprep.subr.bf16.mxu0 0
        %495 = vmatpush1.bf16.msra.mxu0 0
        %496 = vmatprep.subr.bf16.mxu0 0
        %497 = vmatpush1.bf16.msra.mxu0 0
        %498 = vmatprep.subr.bf16.mxu0 0
        %499 = vmatpush1.bf16.msra.mxu0 0
        %500 = vmatprep.subr.bf16.mxu0 0
        %501 = vmatpush1.bf16.msra.mxu0 0
        %502 = vmatprep.subr.bf16.mxu0 0
        %503 = vmatpush1.bf16.msra.mxu0 0
        %504 = vmatprep.subr.bf16.mxu0 0
        %505 = vmatpush1.bf16.msra.mxu0 0
        %506 = vmatprep.subr.bf16.mxu0 0
        %507 = vmatpush1.bf16.msra.mxu0 0
        %508 = vmatprep.mubr.bf16.mxu0 0
        %509 = vmatmul.mubr.bf16.gmra.mrb[0].mxu0 %v412
        %v510 = vpop.f32.mrb[0].mxu0
        %v511 = vadd.f32 0.0, %v510
        %v512 = vpop.f32.mrb[0].mxu0
        %v513 = vpop.f32.mrb[0].mxu0
        %v514 = vadd.f32 0.0, %v513
        %v515 = vpop.f32.mrb[0].mxu0
        %516 = vmatprep.mubr.bf16.mxu0 0
        %517 = vmatmul.mubr.bf16.gmra.mrb[0].mxu0 %v413
        %v518 = vpop.f32.mrb[0].mxu0
        %v519 = vadd.f32 0.0, %v518
        %v520 = vpop.f32.mrb[0].mxu0
        %v521 = vpop.f32.mrb[0].mxu0
        %v522 = vadd.f32 0.0, %v521
        %v523 = vpop.f32.mrb[0].mxu0
        %524 = vmatprep.mubr.bf16.mxu0 0
        %525 = vmatmul.mubr.bf16.gmra.mrb[0].mxu0 %v414
        %v526 = vpop.f32.mrb[0].mxu0
        %v527 = vadd.f32 0.0, %v526
        %v528 = vpop.f32.mrb[0].mxu0
        %v529 = vpop.f32.mrb[0].mxu0
        %v530 = vadd.f32 0.0, %v529
        %v531 = vpop.f32.mrb[0].mxu0
        %532 = vmatprep.mubr.bf16.mxu0 0
        %533 = vmatmul.mubr.bf16.gmra.mrb[0].mxu0 %v415
        %v534 = vpop.f32.mrb[0].mxu0
        %v535 = vadd.f32 0.0, %v534
        %v536 = vpop.f32.mrb[0].mxu0
        %v537 = vpop.f32.mrb[0].mxu0
        %v538 = vadd.f32 0.0, %v537
        %v539 = vpop.f32.mrb[0].mxu0
        %540 = vmatprep.mubr.bf16.mxu0 0
        %541 = vmatmul.mubr.bf16.gmra.mrb[0].mxu0 %v416
        %v542 = vpop.f32.mrb[0].mxu0
        %v543 = vadd.f32 0.0, %v542
        %v544 = vpop.f32.mrb[0].mxu0
        %v545 = vpop.f32.mrb[0].mxu0
        %v546 = vadd.f32 0.0, %v545
        %v547 = vpop.f32.mrb[0].mxu0
        %548 = vmatprep.mubr.bf16.mxu0 0
        %549 = vmatmul.mubr.bf16.gmra.mrb[0].mxu0 %v417
        %v550 = vpop.f32.mrb[0].mxu0
        %v551 = vadd.f32 0.0, %v550
        %v552 = vpop.f32.mrb[0].mxu0
        %v553 = vpop.f32.mrb[0].mxu0
        %v554 = vadd.f32 0.0, %v553
        %v555 = vpop.f32.mrb[0].mxu0
        %556 = vmatprep.mubr.bf16.mxu0 0
        %557 = vmatmul.mubr.bf16.gmra.mrb[0].mxu0 %v418
        %v558 = vpop.f32.mrb[0].mxu0
        %v559 = vadd.f32 0.0, %v558
        %v560 = vpop.f32.mrb[0].mxu0
        %v561 = vpop.f32.mrb[0].mxu0
        %v562 = vadd.f32 0.0, %v561
        %v563 = vpop.f32.mrb[0].mxu0
        %564 = vmatprep.mubr.bf16.mxu0 0
        %565 = vmatmul.mubr.bf16.gmra.mrb[0].mxu0 %v419
        %v566 = vpop.f32.mrb[0].mxu0
        %v567 = vadd.f32 0.0, %v566
        %v568 = vpop.f32.mrb[0].mxu0
        %v569 = vpop.f32.mrb[0].mxu0
        %v570 = vadd.f32 0.0, %v569
        %v571 = vpop.f32.mrb[0].mxu0
        %572 = vdwg.mxu0
        %v573 = vadd.f32 %v332, %v511
        %v574 = vadd.f32 %v333, %v514
        %v575 = vadd.f32 %v334, %v519
        %v576 = vadd.f32 %v335, %v522
        %v577 = vadd.f32 %v336, %v527
        %v578 = vadd.f32 %v337, %v530
        %v579 = vadd.f32 %v338, %v535
        %v580 = vadd.f32 %v339, %v538
        %v581 = vadd.f32 %v340, %v543
        %v582 = vadd.f32 %v341, %v546
        %v583 = vadd.f32 %v342, %v551
        %v584 = vadd.f32 %v343, %v554
        %v585 = vadd.f32 %v344, %v559
        %v586 = vadd.f32 %v345, %v562
        %v587 = vadd.f32 %v346, %v567
        %v588 = vadd.f32 %v347, %v570
        %vm589 = vcmask 261120
        %590 = vst.msk [vmem:[#allocation2] sm:$0xff] %vm589, %v573
        %591 = vst.msk [vmem:[#allocation2 + $0x8] sm:$0xff] %vm589, %v574
        %592 = vst.msk [vmem:[#allocation2 + $0x10] sm:$0xff] %vm589, %v575
        %593 = vst.msk [vmem:[#allocation2 + $0x18] sm:$0xff] %vm589, %v576
        %594 = vst.msk [vmem:[#allocation2 + $0x20] sm:$0xff] %vm589, %v577
        %595 = vst.msk [vmem:[#allocation2 + $0x28] sm:$0xff] %vm589, %v578
        %596 = vst.msk [vmem:[#allocation2 + $0x30] sm:$0xff] %vm589, %v579
        %597 = vst.msk [vmem:[#allocation2 + $0x38] sm:$0xff] %vm589, %v580
        %598 = vst.msk [vmem:[#allocation2 + $0x40] sm:$0xff] %vm589, %v581
        %599 = vst.msk [vmem:[#allocation2 + $0x48] sm:$0xff] %vm589, %v582
        %600 = vst.msk [vmem:[#allocation2 + $0x50] sm:$0xff] %vm589, %v583
        %601 = vst.msk [vmem:[#allocation2 + $0x58] sm:$0xff] %vm589, %v584
        %602 = vst.msk [vmem:[#allocation2 + $0x60] sm:$0xff] %vm589, %v585
        %603 = vst.msk [vmem:[#allocation2 + $0x68] sm:$0xff] %vm589, %v586
        %604 = vst.msk [vmem:[#allocation2 + $0x70] sm:$0xff] %vm589, %v587
        %605 = vst.msk [vmem:[#allocation2 + $0x78] sm:$0xff] %vm589, %v588
        %p606 = scmp.eq.s32.totalorder %s28, 1
        // Predicated region
        $region53: #{tpu_custom_call.1} parent=43 // pred_check
          %p607 = pneg %p606
        $region54: #{tpu_custom_call.1} parent=43 // pred_check_branch
          %609 = sbr.rel (%p607) target = $region56
        $region55: #{tpu_custom_call.1} parent=43 // pred_region
          %v610 = vld [vmem:[#allocation2] sm:$0xff]
          %v611 = vld [vmem:[#allocation2 + $0x8] sm:$0xff]
          %v612 = vld [vmem:[#allocation2 + $0x10] sm:$0xff]
          %v613 = vld [vmem:[#allocation2 + $0x18] sm:$0xff]
          %v614 = vld [vmem:[#allocation2 + $0x20] sm:$0xff]
          %v615 = vld [vmem:[#allocation2 + $0x28] sm:$0xff]
          %v616 = vld [vmem:[#allocation2 + $0x30] sm:$0xff]
          %v617 = vld [vmem:[#allocation2 + $0x38] sm:$0xff]
          %v618 = vld [vmem:[#allocation2 + $0x40] sm:$0xff]
          %v619 = vld [vmem:[#allocation2 + $0x48] sm:$0xff]
          %v620 = vld [vmem:[#allocation2 + $0x50] sm:$0xff]
          %v621 = vld [vmem:[#allocation2 + $0x58] sm:$0xff]
          %v622 = vld [vmem:[#allocation2 + $0x60] sm:$0xff]
          %v623 = vld [vmem:[#allocation2 + $0x68] sm:$0xff]
          %v624 = vld [vmem:[#allocation2 + $0x70] sm:$0xff]
          %v625 = vld [vmem:[#allocation2 + $0x78] sm:$0xff]
          %v626 = vld [vmem:[%s3] sm:$0xff]
          %v627 = vld [vmem:[%s3 + $0x8] sm:$0xff]
          %v628 = vld [vmem:[%s3 + $0x10] sm:$0xff]
          %v629 = vld [vmem:[%s3 + $0x18] sm:$0xff]
          %v630 = vld [vmem:[%s5] sm:$0x1]
          %v632 = vlaneseq
          %v633 = vshrl.u32 %v632, 7
          %v634 = vsub.s32 0, %v633
          %v635 = vrot.slane %v630, %v634
          %v638 = vsel %vm589, %v610, 0
          %v641 = vsel %vm589, %v611, 0
          %v644 = vsel %vm589, %v612, 0
          %v647 = vsel %vm589, %v613, 0
          %v650 = vsel %vm589, %v614, 0
          %v653 = vsel %vm589, %v615, 0
          %v656 = vsel %vm589, %v616, 0
          %v659 = vsel %vm589, %v617, 0
          %v662 = vsel %vm589, %v618, 0
          %v665 = vsel %vm589, %v619, 0
          %v668 = vsel %vm589, %v620, 0
          %v671 = vsel %vm589, %v621, 0
          %v674 = vsel %vm589, %v622, 0
          %v677 = vsel %vm589, %v623, 0
          %v680 = vsel %vm589, %v624, 0
          %v683 = vsel %vm589, %v625, 0
          %685 = vmatprep.subr.mxu0 0.0
          %686 = vmatpush1.msra.mxu0 %v626
          %687 = vmatprep.subr.mxu0 0.0
          %688 = vmatpush1.msra.mxu0 %v627
          %689 = vmatprep.subr.mxu0 0.0
          %690 = vmatpush1.msra.mxu0 %v628
          %691 = vmatprep.subr.mxu0 0.0
          %692 = vmatpush1.msra.mxu0 %v629
          %693 = vmatprep.subr.mxu0 0.0
          %694 = vmatpush1.msra.mxu0 0.0
          %695 = vmatprep.subr.mxu0 0.0
          %696 = vmatpush1.msra.mxu0 0.0
          %697 = vmatprep.subr.mxu0 0.0
          %698 = vmatpush1.msra.mxu0 0.0
          %699 = vmatprep.subr.mxu0 0.0
          %700 = vmatpush1.msra.mxu0 0.0
          %701 = vmatprep.subr.mxu0 0.0
          %702 = vmatpush1.msra.mxu0 0.0
          %703 = vmatprep.subr.mxu0 0.0
          %704 = vmatpush1.msra.mxu0 0.0
          %705 = vmatprep.subr.mxu0 0.0
          %706 = vmatpush1.msra.mxu0 0.0
          %707 = vmatprep.subr.mxu0 0.0
          %708 = vmatpush1.msra.mxu0 0.0
          %709 = vmatprep.subr.mxu0 0.0
          %710 = vmatpush1.msra.mxu0 0.0
          %711 = vmatprep.subr.mxu0 0.0
          %712 = vmatpush1.msra.mxu0 0.0
          %713 = vmatprep.subr.mxu0 0.0
          %714 = vmatpush1.msra.mxu0 0.0
          %715 = vmatprep.subr.mxu0 0.0
          %716 = vmatpush1.msra.mxu0 0.0
          %717 = vmatprep.subr.mxu0 0.0
          %718 = vmatpush1.msra.mxu0 0.0
          %719 = vmatprep.subr.mxu0 0.0
          %720 = vmatpush1.msra.mxu0 0.0
          %721 = vmatprep.subr.mxu0 0.0
          %722 = vmatpush1.msra.mxu0 0.0
          %723 = vmatprep.subr.mxu0 0.0
          %724 = vmatpush1.msra.mxu0 0.0
          %725 = vmatprep.subr.mxu0 0.0
          %726 = vmatpush1.msra.mxu0 0.0
          %727 = vmatprep.subr.mxu0 0.0
          %728 = vmatpush1.msra.mxu0 0.0
          %729 = vmatprep.subr.mxu0 0.0
          %730 = vmatpush1.msra.mxu0 0.0
          %731 = vmatprep.subr.mxu0 0.0
          %732 = vmatpush1.msra.mxu0 0.0
          %733 = vmatprep.subr.mxu0 0.0
          %734 = vmatpush1.msra.mxu0 0.0
          %735 = vmatprep.subr.mxu0 0.0
          %736 = vmatpush1.msra.mxu0 0.0
          %737 = vmatprep.subr.mxu0 0.0
          %738 = vmatpush1.msra.mxu0 0.0
          %739 = vmatprep.subr.mxu0 0.0
          %740 = vmatpush1.msra.mxu0 0.0
          %741 = vmatprep.subr.mxu0 0.0
          %742 = vmatpush1.msra.mxu0 0.0
          %743 = vmatprep.subr.mxu0 0.0
          %744 = vmatpush1.msra.mxu0 0.0
          %745 = vmatprep.subr.mxu0 0.0
          %746 = vmatpush1.msra.mxu0 0.0
          %747 = vmatprep.subr.mxu0 0.0
          %748 = vmatpush1.msra.mxu0 0.0
          %749 = vmatprep.mubr.f32.mxu0 0.0
          %750 = vmatmul.mubr.f32.gmra.mrb[0].mxu0 %v638
          %v751 = vpop.f32.mrb[0].mxu0
          %v752 = vadd.f32 %v635, %v751
          %v753 = vpop.f32.mrb[0].mxu0
          %754 = vmatprep.mubr.f32.mxu0 0.0
          %755 = vmatmul.mubr.f32.gmra.mrb[0].mxu0 %v641
          %v756 = vpop.f32.mrb[0].mxu0
          %v757 = vadd.f32 %v635, %v756
          %v758 = vpop.f32.mrb[0].mxu0
          %759 = vmatprep.mubr.f32.mxu0 0.0
          %760 = vmatmul.mubr.f32.gmra.mrb[0].mxu0 %v644
          %v761 = vpop.f32.mrb[0].mxu0
          %v762 = vadd.f32 %v635, %v761
          %v763 = vpop.f32.mrb[0].mxu0
          %764 = vmatprep.mubr.f32.mxu0 0.0
          %765 = vmatmul.mubr.f32.gmra.mrb[0].mxu0 %v647
          %v766 = vpop.f32.mrb[0].mxu0
          %v767 = vadd.f32 %v635, %v766
          %v768 = vpop.f32.mrb[0].mxu0
          %769 = vmatprep.mubr.f32.mxu0 0.0
          %770 = vmatmul.mubr.f32.gmra.mrb[0].mxu0 %v650
          %v771 = vpop.f32.mrb[0].mxu0
          %v772 = vadd.f32 %v635, %v771
          %v773 = vpop.f32.mrb[0].mxu0
          %774 = vmatprep.mubr.f32.mxu0 0.0
          %775 = vmatmul.mubr.f32.gmra.mrb[0].mxu0 %v653
          %v776 = vpop.f32.mrb[0].mxu0
          %v777 = vadd.f32 %v635, %v776
          %v778 = vpop.f32.mrb[0].mxu0
          %779 = vmatprep.mubr.f32.mxu0 0.0
          %780 = vmatmul.mubr.f32.gmra.mrb[0].mxu0 %v656
          %v781 = vpop.f32.mrb[0].mxu0
          %v782 = vadd.f32 %v635, %v781
          %v783 = vpop.f32.mrb[0].mxu0
          %784 = vmatprep.mubr.f32.mxu0 0.0
          %785 = vmatmul.mubr.f32.gmra.mrb[0].mxu0 %v659
          %v786 = vpop.f32.mrb[0].mxu0
          %v787 = vadd.f32 %v635, %v786
          %v788 = vpop.f32.mrb[0].mxu0
          %789 = vmatprep.mubr.f32.mxu0 0.0
          %790 = vmatmul.mubr.f32.gmra.mrb[0].mxu0 %v662
          %v791 = vpop.f32.mrb[0].mxu0
          %v792 = vadd.f32 %v635, %v791
          %v793 = vpop.f32.mrb[0].mxu0
          %794 = vmatprep.mubr.f32.mxu0 0.0
          %795 = vmatmul.mubr.f32.gmra.mrb[0].mxu0 %v665
          %v796 = vpop.f32.mrb[0].mxu0
          %v797 = vadd.f32 %v635, %v796
          %v798 = vpop.f32.mrb[0].mxu0
          %799 = vmatprep.mubr.f32.mxu0 0.0
          %800 = vmatmul.mubr.f32.gmra.mrb[0].mxu0 %v668
          %v801 = vpop.f32.mrb[0].mxu0
          %v802 = vadd.f32 %v635, %v801
          %v803 = vpop.f32.mrb[0].mxu0
          %804 = vmatprep.mubr.f32.mxu0 0.0
          %805 = vmatmul.mubr.f32.gmra.mrb[0].mxu0 %v671
          %v806 = vpop.f32.mrb[0].mxu0
          %v807 = vadd.f32 %v635, %v806
          %v808 = vpop.f32.mrb[0].mxu0
          %809 = vmatprep.mubr.f32.mxu0 0.0
          %810 = vmatmul.mubr.f32.gmra.mrb[0].mxu0 %v674
          %v811 = vpop.f32.mrb[0].mxu0
          %v812 = vadd.f32 %v635, %v811
          %v813 = vpop.f32.mrb[0].mxu0
          %814 = vmatprep.mubr.f32.mxu0 0.0
          %815 = vmatmul.mubr.f32.gmra.mrb[0].mxu0 %v677
          %v816 = vpop.f32.mrb[0].mxu0
          %v817 = vadd.f32 %v635, %v816
          %v818 = vpop.f32.mrb[0].mxu0
          %819 = vmatprep.mubr.f32.mxu0 0.0
          %820 = vmatmul.mubr.f32.gmra.mrb[0].mxu0 %v680
          %v821 = vpop.f32.mrb[0].mxu0
          %v822 = vadd.f32 %v635, %v821
          %v823 = vpop.f32.mrb[0].mxu0
          %824 = vmatprep.mubr.f32.mxu0 0.0
          %825 = vmatmul.mubr.f32.gmra.mrb[0].mxu0 %v683
          %v826 = vpop.f32.mrb[0].mxu0
          %v827 = vadd.f32 %v635, %v826
          %v828 = vpop.f32.mrb[0].mxu0
          %829 = vdwg.mxu0
          %830 = vst [vmem:[%s301] sm:$0xff] %v752
          %831 = vst [vmem:[%s301 + $0x8] sm:$0xff] %v757
          %832 = vst [vmem:[%s301 + $0x10] sm:$0xff] %v762
          %833 = vst [vmem:[%s301 + $0x18] sm:$0xff] %v767
          %834 = vst [vmem:[%s301 + $0x20] sm:$0xff] %v772
          %835 = vst [vmem:[%s301 + $0x28] sm:$0xff] %v777
          %836 = vst [vmem:[%s301 + $0x30] sm:$0xff] %v782
          %837 = vst [vmem:[%s301 + $0x38] sm:$0xff] %v787
          %838 = vst [vmem:[%s301 + $0x40] sm:$0xff] %v792
          %839 = vst [vmem:[%s301 + $0x48] sm:$0xff] %v797
          %840 = vst [vmem:[%s301 + $0x50] sm:$0xff] %v802
          %841 = vst [vmem:[%s301 + $0x58] sm:$0xff] %v807
          %842 = vst [vmem:[%s301 + $0x60] sm:$0xff] %v812
          %843 = vst [vmem:[%s301 + $0x68] sm:$0xff] %v817
          %844 = vst [vmem:[%s301 + $0x70] sm:$0xff] %v822
          %845 = vst [vmem:[%s301 + $0x78] sm:$0xff] %v827
        $region56: #{tpu_custom_call.1} parent=43 // pred_fallthru
          _
        %s846 = sand.u32 %s181, 1
        %s847 = scalar_lea.sflag [#allocation5], %s846
        %s848 = sand.u32 %s181, 1
        %s849 = smul.addr %s848, 128
        %s850 = scalar_lea.vmem [#allocation6], %s849
        // Predicated region
        $region57: #{tpu_custom_call.1} parent=43 // pred_check
          %p851 = pneg %p191
        $region58: #{tpu_custom_call.1} parent=43 // pred_check_branch
          %853 = sbr.rel (%p851) target = $region60
        $region59: #{tpu_custom_call.1} parent=43 // pred_region
          %s854 = smul.u32 16, %s27
          %s856 = ssub.s32 2048, 2048
          %857 = vsyncadd %s847, %s856
          %s858 = smul.addr %s854, 128
          %s859 = scalar_lea.hbm %s6, %s858
          %s860 = sshll.u32 %s850, 4
          %s861 = int_to_ptr.vmem [resolvable:$true] %s860
          %866 = dma.vmem_to_hbm [thread:$0]  %s861, 2048, %s859, %s847, 128, 128, 8
        $region60: #{tpu_custom_call.1} parent=43 // pred_fallthru
          _
      $region44: #{tpu_custom_call.1} parent=5 // pred_fallthru
        _
      %p867 = scmp.le.s32.totalorder 2, %s18
      // Predicated region
      $region61: #{tpu_custom_call.1} parent=5 // pred_check
        %p868 = pneg %p867
      $region62: #{tpu_custom_call.1} parent=5 // pred_check_branch
        %870 = sbr.rel (%p868) target = $region64
      $region63: #{tpu_custom_call.1} parent=5 // pred_region
        %s871 = ssub.s32 %s18, 2
        // Predicated region
        $region65: #{tpu_custom_call.1} parent=63 // pred_check
          %p872 = pneg %p197
        $region66: #{tpu_custom_call.1} parent=63 // pred_check_branch
          %874 = sbr.rel (%p872) target = $region68
        $region67: #{tpu_custom_call.1} parent=63 // pred_region
          %s875 = sand.u32 %s182, 1
          %s876 = scalar_lea.sflag [#allocation5], %s875
          %s877 = sand.u32 %s182, 1
          %s878 = smul.addr %s877, 128
          %s879 = scalar_lea.vmem [#allocation6], %s878
          %880 = dma.done %s876, 2048
        $region68: #{tpu_custom_call.1} parent=63 // pred_fallthru
          _
      $region64: #{tpu_custom_call.1} parent=5 // pred_fallthru
        _
    $region6: #{tpu_custom_call.1} parent=1 // loop_footer
      %s22 = sadd.s32 1, %s18
    $region7: #{tpu_custom_call.1} parent=1 // loop_footer_branch
      %17 = sbr.rel target = $region3
    $region8: #{tpu_custom_call.1} parent=1 // loop_exit
      _
    %881 = vsyncpa [#allocation4], 1
    %s882 = scalar_lea.sflag [#allocation4], 1
    %883 = vsyncpa %s882, 1
    %884 = vsyncpa [#allocation5], 1
    %s885 = scalar_lea.sflag [#allocation5], 1
    %886 = vsyncpa %s885, 1

</llo_original>
